<compile_context>
chip_gen: v7x
topology: tpu7x:2x2x1
jax: 0.10.0
libtpu: 0.0.40
codegen_flags: <defaults>
</compile_context>

<pallas_src>
import jax
import jax.numpy as jnp
from jax import lax
from jax.experimental import pallas as pl
from jax.experimental.pallas import tpu as pltpu


def _round_up(v, m):
    return ((v + m - 1) // m) * m


def _vmem_budget_bytes():
    """~75% of physical VMEM (capped at 96 MiB); v7x-safe 48 MiB fallback."""
    cap = 64 * 1024 * 1024
    try:
        cap = int(pltpu.get_tpu_info().vmem_capacity_bytes)
    except Exception:
        pass
    return min((cap * 3) // 4, 96 * 1024 * 1024)


def _make_kernel(has_bias, use_scratch, kn_layout):
    """Tiled linear kernel.  Refs (in order):
      x_ref  : (tm, tk) input tile (f32 or bf16)
      w_ref  : (tn, tk) weight tile [PyTorch (N,K) layout]   if not kn_layout
               (tk, tn) weight tile [pre-transposed (K,N)]    if kn_layout
      b_ref  : (1, tn)  f32 bias tile                          (only has_bias)
      o_ref  : (tm, tn) output tile (resident across the K grid axis)
      acc_ref: (tm, tn) f32 scratch                            (only use_scratch)
    """
    # Contract the K axis of both operands; no per-call HBM transpose needed.
    dn = (((1,), (0,)), ((), ())) if kn_layout else (((1,), (1,)), ((), ()))

    def kernel(*refs):
        refs = list(refs)
        x_ref = refs.pop(0)
        w_ref = refs.pop(0)
        b_ref = refs.pop(0) if has_bias else None
        o_ref = refs.pop(0)
        acc_ref = refs.pop(0) if use_scratch else o_ref  # f32 out: accumulate in place

        k = pl.program_id(2)

        @pl.when(k == 0)
        def _():
            acc_ref[...] = jnp.zeros_like(acc_ref)

        acc_ref[...] += lax.dot_general(
            x_ref[...], w_ref[...],
            dimension_numbers=dn,
            preferred_element_type=jnp.float32,
        )

        if use_scratch or has_bias:
            @pl.when(k == pl.num_programs(2) - 1)
            def _():
                if use_scratch:
                    out = acc_ref[...]
                    if b_ref is not None:
                        out = out + b_ref[...]          # f32 bias, added once
                    o_ref[...] = out.astype(o_ref.dtype)
                else:
                    o_ref[...] += b_ref[...]            # f32 bias, added once

    return kernel


def prepare_weight(weight, *, to_kn=True, bf16=False):
    """One-time weight prep (do this at init, NOT per call): optional transpose
    to (K, N) layout and/or bf16 cast, so repeated forward calls pay zero
    HBM-side weight transforms beyond the tiling DMAs themselves."""
    w = weight.T if to_kn else weight
    return w.astype(jnp.bfloat16) if bf16 else w


def custom_linear(x, weight, bias=None, *, weight_layout="nk",
                  bf16_matmul=False, tm=1024, tn=1024, tk=1024,
                  weight_buffers=2, vmem_limit_bytes=None):
    """Forward pass of CustomLinear: x @ W.T (+ bias).

    x:      (M, K)
    weight: (N, K) if weight_layout == "nk" (PyTorch layout), else (K, N)
    bias:   (N,) or None   (always applied in f32)
    """
    assert weight_layout in ("nk", "kn")
    M, K = x.shape
    if weight_layout == "nk":
        N, Kw = weight.shape
    else:
        Kw, N = weight.shape
    assert K == Kw, "in_features mismatch"

    out_dtype = x.dtype
    in_dtype = jnp.bfloat16 if bf16_matmul else x.dtype
    in_itemsize = jnp.dtype(in_dtype).itemsize
    out_itemsize = jnp.dtype(out_dtype).itemsize
    # bf16 packs two rows per sublane -> second-minor dims want multiples of 16.
    sub_m = 16 if in_itemsize == 2 else 8

    # Clamp tiles to the (padded) problem so tiny layers don't over-pad.
    tm = _round_up(max(sub_m, min(tm, _round_up(M, sub_m))), sub_m)
    tn = _round_up(max(128, min(tn, _round_up(N, 128))), 128)
    tk = _round_up(max(128, min(tk, _round_up(K, 128))), 128)

    # f32 outputs accumulate directly into o_ref (resident across K axis).
    use_scratch = out_dtype != jnp.float32
    has_bias = bias is not None

    # Shrink tiles until the (roughly double-buffered) footprint fits VMEM.
    budget = int(vmem_limit_bytes) if vmem_limit_bytes else _vmem_budget_bytes()

    def _footprint(tm_, tn_, tk_):
        fp = 2 * tm_ * tk_ * in_itemsize                     # x stream
        fp += max(2, weight_buffers) * tn_ * tk_ * in_itemsize  # weight stream
        fp += 2 * tm_ * tn_ * out_itemsize                   # output tile
        if use_scratch:
            fp += tm_ * tn_ * 4                              # f32 accumulator
        if has_bias:
            fp += 2 * tn_ * 4
        return fp

    while _footprint(tm, tn, tk) > budget and max(tm, tn, tk) > 256:
        if tk >= tm and tk >= tn and tk > 128:
            tk = _round_up(max(128, tk // 2), 128)
        elif tn >= tm and tn > 128:
            tn = _round_up(max(128, tn // 2), 128)
        else:
            tm = _round_up(max(sub_m, tm // 2), sub_m)

    Mp, Np, Kp = _round_up(M, tm), _round_up(N, tn), _round_up(K, tk)

    # v7x has 2 TensorCores: if there is only one (M, N) output tile but the
    # N axis can be split, halve tn so both cores get a parallel block.
    if Mp // tm == 1 and Np // tn == 1 and tn >= 256:
        tn_half = _round_up(tn // 2, 128)
        if _round_up(N, tn_half) // tn_half >= 2:
            tn = tn_half
            Np = _round_up(N, tn)

    # Cast in the wrapper (HBM side) so the kernel streams half the bytes when
    # bf16_matmul is enabled; accumulation stays f32 on the MXU.
    xc = x if x.dtype == in_dtype else x.astype(in_dtype)
    wc = weight if weight.dtype == in_dtype else weight.astype(in_dtype)

    # Zero padding is exact: padded K contributes 0, padded M/N sliced away.
    # TODO(synk): for large, repeatedly used weights, pre-pad/cast once at init
    # (see prepare_weight) instead of paying this jnp.pad each call.
    xp = xc if (Mp == M and Kp == K) else jnp.pad(xc, ((0, Mp - M), (0, Kp - K)))
    if weight_layout == "nk":
        wp = wc if (Np == N and Kp == K) else jnp.pad(wc, ((0, Np - N), (0, Kp - K)))
        w_block = (tn, tk)
        w_index = lambda i, j, k: (j, k)
    else:
        wp = wc if (Np == N and Kp == K) else jnp.pad(wc, ((0, Kp - K), (0, Np - N)))
        w_block = (tk, tn)
        w_index = lambda i, j, k: (k, j)

    if weight_buffers != 2:
        # Deeper pipelining on the weight stream for the small-M,
        # weight-streaming-bound regime (sweep 2-3).
        w_spec = pl.BlockSpec(w_block, w_index,
                              pipeline_mode=pl.Buffered(weight_buffers))
    else:
        w_spec = pl.BlockSpec(w_block, w_index)

    operands = [xp, wp]
    in_specs = [pl.BlockSpec((tm, tk), lambda i, j, k: (i, k)), w_spec]
    if has_bias:
        bp = bias.astype(jnp.float32)          # keep bias f32 (added to f32 acc)
        if Np != N:
            bp = jnp.pad(bp, (0, Np - N))
        operands.append(bp.reshape(1, Np))
        in_specs.append(pl.BlockSpec((1, tn), lambda i, j, k: (0, j)))

    gm, gn, gk = Mp // tm, Np // tn, Kp // tk

    cost = pl.CostEstimate(
        flops=2 * Mp * Np * Kp,
        transcendentals=0,
        bytes_accessed=(gn * Mp * Kp * in_itemsize       # x streamed once per N-block
                        + gm * Np * Kp * in_itemsize     # weight once per M-block
                        + Mp * Np * out_itemsize
                        + (Np * 4 if has_bias else 0)),
    )

    out = pl.pallas_call(
        _make_kernel(has_bias, use_scratch, weight_layout == "kn"),
        out_shape=jax.ShapeDtypeStruct((Mp, Np), out_dtype),
        grid_spec=pltpu.PrefetchScalarGridSpec(
            num_scalar_prefetch=0,
            grid=(gm, gn, gk),
            in_specs=in_specs,
            out_specs=pl.BlockSpec((tm, tn), lambda i, j, k: (i, j)),
            scratch_shapes=(tuple([pltpu.VMEM((tm, tn), jnp.float32)])
                            if use_scratch else ()),
        ),
        compiler_params=pltpu.CompilerParams(
            dimension_semantics=("parallel", "parallel", "arbitrary"),
            vmem_limit_bytes=budget,
        ),
        cost_estimate=cost,
    )(*operands)

    if Mp != M or Np != N:
        out = out[:M, :N]
    return out


def init_custom_linear_params(key, input_features, output_features, bias=True):
    """Mirror the PyTorch module init: kaiming_normal_ on weight
    (fan_in mode: std = sqrt(2 / fan_in)), zeros for bias."""
    wkey, _ = jax.random.split(key)
    std = (2.0 / input_features) ** 0.5
    weight = std * jax.random.normal(
        wkey, (output_features, input_features), dtype=jnp.float32)
    b = jnp.zeros((output_features,), dtype=jnp.float32) if bias else None
    return weight, b


# TODO(synk): LinearFunction.backward (grad_input / grad_weight / grad_bias) is
# not implemented here; only the forward pass is translated.

if __name__ == "__main__":
    key = jax.random.PRNGKey(0)
    xkey, pkey = jax.random.split(key)

    batch = 8
    in_features = 32
    out_features = 64

    x = jax.random.normal(xkey, (batch, in_features), dtype=jnp.float32)
    weight, bias = init_custom_linear_params(pkey, in_features, out_features,
                                             bias=True)
    y_ref = x @ weight.T + bias[None, :]

    # f32, bias, PyTorch (N, K) weight layout.
    y = custom_linear(x, weight, bias)
    jax.block_until_ready(y)
    assert y.shape == (batch, out_features)
    assert jnp.allclose(y, y_ref, atol=2e-5, rtol=2e-5)

    # No-bias variant (separate kernel, no zeros array, no finalize work).
    y_nb = custom_linear(x, weight, None)
    jax.block_until_ready(y_nb)
    assert jnp.allclose(y_nb, x @ weight.T, atol=2e-5, rtol=2e-5)

    # Pre-transposed (K, N) weight layout: one-time transpose at init, zero
    # per-step XLU transpose risk in the kernel.
    w_kn = prepare_weight(weight, to_kn=True)
    y_kn = custom_linear(x, w_kn, bias, weight_layout="kn")
    jax.block_until_ready(y_kn)
    assert jnp.allclose(y_kn, y_ref, atol=2e-5, rtol=2e-5)

    # bf16 matmul inputs, cast HBM-side (f32 accumulation) -- looser tolerance
    # by design; this path trades a little precision for ~2x HBM bandwidth.
    y_bf = custom_linear(x, weight, bias, bf16_matmul=True)
    jax.block_until_ready(y_bf)
    assert jnp.allclose(y_bf, y_ref, atol=5e-2, rtol=5e-2)

    print("KERNEL_OK")
</pallas_src>

<mosaic_0001>
module attributes {stable_mosaic.version = 11 : i64} {
  func.func @kernel(%arg0: i32, %arg1: i32, %arg2: i32, %arg3: memref<8x128xf32, #tpu.memory_space<vmem>>, %arg4: memref<128x128xf32, #tpu.memory_space<vmem>>, %arg5: memref<1x128xf32, #tpu.memory_space<vmem>>, %arg6: memref<8x128xf32, #tpu.memory_space<vmem>>) attributes {dimension_semantics = [#tpu.dimension_semantics<parallel>, #tpu.dimension_semantics<parallel>, #tpu.dimension_semantics<arbitrary>], iteration_bounds = array<i64: 1, 1, 1>, scalar_prefetch = 0 : i64, scratch_operands = 0 : i64, tpu.core_type = #tpu.core_type<tc>, window_params = [{transform_indices = @transform_0, window_bounds = array<i64: 8, 128>}, {transform_indices = @transform_1, window_bounds = array<i64: 128, 128>}, {transform_indices = @transform_2, window_bounds = array<i64: 1, 128>}, {transform_indices = @transform_3, window_bounds = array<i64: 8, 128>}]} {
    %c0_i32 = arith.constant 0 : i32
    %0 = arith.cmpi eq, %arg2, %c0_i32 : i32
    %1 = arith.extui %0 : i1 to i32
    %c0_i32_0 = arith.constant 0 : i32
    %2 = arith.cmpi ne, %1, %c0_i32_0 : i32
    scf.if %2 {
      %cst_10 = arith.constant 0.000000e+00 : f32
      %12 = vector.broadcast %cst_10 : f32 to vector<8x128xf32>
      %c0_11 = arith.constant 0 : index
      %c0_12 = arith.constant 0 : index
      %13 = vector.load %arg6[%c0_11, %c0_12] : memref<8x128xf32, #tpu.memory_space<vmem>>, vector<8x128xf32>
      tpu.vector_store %arg6[%c0_11, %c0_12], %12 {strides = array<i32>} : memref<8x128xf32, #tpu.memory_space<vmem>>, vector<8x128xf32>,
    } else {
    }
    %c0 = arith.constant 0 : index
    %c0_1 = arith.constant 0 : index
    %3 = vector.load %arg6[%c0, %c0_1] : memref<8x128xf32, #tpu.memory_space<vmem>>, vector<8x128xf32>
    %c0_2 = arith.constant 0 : index
    %c0_3 = arith.constant 0 : index
    %4 = vector.load %arg3[%c0_2, %c0_3] : memref<8x128xf32, #tpu.memory_space<vmem>>, vector<8x128xf32>
    %c0_4 = arith.constant 0 : index
    %c0_5 = arith.constant 0 : index
    %5 = vector.load %arg4[%c0_4, %c0_5] : memref<128x128xf32, #tpu.memory_space<vmem>>, vector<128x128xf32>
    %cst = arith.constant dense<0.000000e+00> : vector<8x128xf32>
    %6 = tpu.matmul %4, %5, %cst {dimension_numbers = #tpu.dot_dimension_numbers<[1], [1], [0], [0], [0, 0, 1, 0], [], []>} : vector<8x128xf32>, vector<128x128xf32>, vector<8x128xf32> -> vector<8x128xf32>
    %7 = arith.addf %3, %6 : vector<8x128xf32>
    %c0_6 = arith.constant 0 : index
    %c0_7 = arith.constant 0 : index
    %8 = vector.load %arg6[%c0_6, %c0_7] : memref<8x128xf32, #tpu.memory_space<vmem>>, vector<8x128xf32>
    tpu.vector_store %arg6[%c0_6, %c0_7], %7 {strides = array<i32>} : memref<8x128xf32, #tpu.memory_space<vmem>>, vector<8x128xf32>,
    %c0_i32_8 = arith.constant 0 : i32
    %9 = arith.cmpi eq, %arg2, %c0_i32_8 : i32
    %10 = arith.extui %9 : i1 to i32
    %c0_i32_9 = arith.constant 0 : i32
    %11 = arith.cmpi ne, %10, %c0_i32_9 : i32
    scf.if %11 {
      %c0_10 = arith.constant 0 : index
      %c0_11 = arith.constant 0 : index
      %12 = vector.load %arg6[%c0_10, %c0_11] : memref<8x128xf32, #tpu.memory_space<vmem>>, vector<8x128xf32>
      %c0_12 = arith.constant 0 : index
      %c0_13 = arith.constant 0 : index
      %13 = vector.load %arg5[%c0_12, %c0_13] : memref<1x128xf32, #tpu.memory_space<vmem>>, vector<1x128xf32>
      %14 = vector.broadcast %13 : vector<1x128xf32> to vector<8x128xf32>
      %15 = arith.addf %12, %14 : vector<8x128xf32>
      %c0_14 = arith.constant 0 : index
      %c0_15 = arith.constant 0 : index
      %16 = vector.load %arg6[%c0_14, %c0_15] : memref<8x128xf32, #tpu.memory_space<vmem>>, vector<8x128xf32>
      tpu.vector_store %arg6[%c0_14, %c0_15], %15 {strides = array<i32>} : memref<8x128xf32, #tpu.memory_space<vmem>>, vector<8x128xf32>,
    } else {
    }
    return
  }
  func.func @transform_0(%arg0: i32, %arg1: i32, %arg2: i32) -> (i32, i32) {
    %c0_i32 = arith.constant 0 : i32
    return %arg0, %arg2 : i32, i32
  }
  func.func @transform_1(%arg0: i32, %arg1: i32, %arg2: i32) -> (i32, i32) {
    %c0_i32 = arith.constant 0 : i32
    return %arg1, %arg2 : i32, i32
  }
  func.func @transform_2(%arg0: i32, %arg1: i32, %arg2: i32) -> (i32, i32) {
    %c0_i32 = arith.constant 0 : i32
    %c0_i32_0 = arith.constant 0 : i32
    return %c0_i32, %arg1 : i32, i32
  }
  func.func @transform_3(%arg0: i32, %arg1: i32, %arg2: i32) -> (i32, i32) {
    %c0_i32 = arith.constant 0 : i32
    return %arg0, %arg1 : i32, i32
  }
}

</mosaic_0001>

<llo_original>
// kernel: tpu_custom_call.1
$region0: #{tpu_custom_call.1}
  #allocation0 [shape = 'u32[]', space=smem, size = 0x4, offset = 0x4, fixed_abs, tag = 'smem constant byte address 0x4 - core index']
  #allocation1 [shape = 'u32[144,128]{1,0:T(1,128)}', space=vmem, size = 0x12000, scoped, tag = 'internal scratch']
  %s0 = inlined_call_operand.hbm [shape: f32[8,128], index: 0, kind: input, shape index: {}]
  %s1 = inlined_call_operand.hbm [shape: f32[128,128], index: 1, kind: input, shape index: {}]
  %s2 = inlined_call_operand.vmem [shape: f32[1,128], index: 2, kind: input, shape index: {}]
  %s3 = inlined_call_operand.hbm [shape: f32[8,128], index: 3, kind: output, shape index: {}]
  %s4 = sld [smem:[#allocation0]]
  $region38: #{tpu_custom_call.1} parent=0
    _
  %s6 = ssub.s32 1, %s4
  %s7 = scalar_select 0, %s6, %s4
  $region1: #{tpu_custom_call.1} parent=0
    #allocation2 [shape = 'u8[4096]{0}', space=vmem, size = 0x1000, scoped, tag = 'input window, operand 0, single buffered']
    #allocation3 [shape = 's32[1]{0}', space=sflag, size = 0x4, scoped, tag = 'scoped memory for tpu_custom_call.1']
    #allocation4 [shape = 's32[1]{0}', space=sflag, size = 0x4, scoped, tag = 'scoped memory for tpu_custom_call.1']
    #allocation5 [shape = 'u8[65536]{0}', space=vmem, size = 0x10000, scoped, tag = 'input window, operand 1, single buffered']
    #allocation6 [shape = 's32[1]{0}', space=sflag, size = 0x4, scoped, tag = 'scoped memory for tpu_custom_call.1']
    #allocation7 [shape = 'u8[4096]{0}', space=vmem, size = 0x1000, scoped, tag = 'output window, operand 0, single buffered']
    %8 = vsyncpa [#allocation3], 0
    %9 = vsyncpa [#allocation6], 0
    %10 = vsyncpa [#allocation4], 0
    // Predicated region
    $region2: #{tpu_custom_call.1} parent=1 // pred_check
      _
    $region3: #{tpu_custom_call.1} parent=1 // pred_check_branch
      %12 = sbr.rel (0) target = $region5
    $region4: #{tpu_custom_call.1} parent=1 // pred_region
      %s14 = ssub.s32 128, 128
      %15 = vsyncadd [#allocation3], %s14
      %s17 = sshll.u32 [#allocation2], 4
      %s18 = int_to_ptr.vmem [resolvable:$true] %s17
      %20 = dma.hbm_to_vmem [thread:$0]  %s0, 128, %s18, [#allocation3]
    $region5: #{tpu_custom_call.1} parent=1 // pred_fallthru
      _
    // Predicated region
    $region6: #{tpu_custom_call.1} parent=1 // pred_check
      _
    $region7: #{tpu_custom_call.1} parent=1 // pred_check_branch
      %22 = sbr.rel (0) target = $region9
    $region8: #{tpu_custom_call.1} parent=1 // pred_region
      %s24 = ssub.s32 2048, 2048
      %25 = vsyncadd [#allocation6], %s24
      %s26 = sshll.u32 [#allocation5], 4
      %s27 = int_to_ptr.vmem [resolvable:$true] %s26
      %32 = dma.hbm_to_vmem [thread:$0]  %s1, 2048, %s27, [#allocation6], 128, 128, 8
    $region9: #{tpu_custom_call.1} parent=1 // pred_fallthru
      _
    // Predicated region
    $region10: #{tpu_custom_call.1} parent=1 // pred_check
      _
    $region11: #{tpu_custom_call.1} parent=1 // pred_check_branch
      %34 = sbr.rel (0) target = $region13
    $region12: #{tpu_custom_call.1} parent=1 // pred_region
      _
    $region13: #{tpu_custom_call.1} parent=1 // pred_fallthru
      _
    // Predicated region
    $region14: #{tpu_custom_call.1} parent=1 // pred_check
      _
    $region15: #{tpu_custom_call.1} parent=1 // pred_check_branch
      %36 = sbr.rel (0) target = $region17
    $region16: #{tpu_custom_call.1} parent=1 // pred_region
      %37 = dma.done [#allocation3], 128
    $region17: #{tpu_custom_call.1} parent=1 // pred_fallthru
      _
    // Predicated region
    $region18: #{tpu_custom_call.1} parent=1 // pred_check
      _
    $region19: #{tpu_custom_call.1} parent=1 // pred_check_branch
      %39 = sbr.rel (0) target = $region21
    $region20: #{tpu_custom_call.1} parent=1 // pred_region
      %40 = dma.done [#allocation6], 2048
    $region21: #{tpu_custom_call.1} parent=1 // pred_fallthru
      _
    %p41 = scmp.eq.s32.totalorder 0, 0
    // Predicated region
    $region22: #{tpu_custom_call.1} parent=1 // pred_check
      %p42 = pneg %p41
    $region23: #{tpu_custom_call.1} parent=1 // pred_check_branch
      %44 = sbr.rel (%p42) target = $region25
    $region24: #{tpu_custom_call.1} parent=1 // pred_region
      %45 = vst [vmem:[#allocation7] sm:$0xff] 0.0
    $region25: #{tpu_custom_call.1} parent=1 // pred_fallthru
      _
    %v46 = vld [vmem:[#allocation7] sm:$0xff]
    %v47 = vld [vmem:[#allocation2] sm:$0xff]
    %v48 = vld [vmem:[#allocation5] sm:$0xff]
    %v49 = vld [vmem:[#allocation5 + $0x8] sm:$0xff]
    %v50 = vld [vmem:[#allocation5 + $0x10] sm:$0xff]
    %v51 = vld [vmem:[#allocation5 + $0x18] sm:$0xff]
    %v52 = vld [vmem:[#allocation5 + $0x20] sm:$0xff]
    %v53 = vld [vmem:[#allocation5 + $0x28] sm:$0xff]
    %v54 = vld [vmem:[#allocation5 + $0x30] sm:$0xff]
    %v55 = vld [vmem:[#allocation5 + $0x38] sm:$0xff]
    %v56 = vld [vmem:[#allocation5 + $0x40] sm:$0xff]
    %v57 = vld [vmem:[#allocation5 + $0x48] sm:$0xff]
    %v58 = vld [vmem:[#allocation5 + $0x50] sm:$0xff]
    %v59 = vld [vmem:[#allocation5 + $0x58] sm:$0xff]
    %v60 = vld [vmem:[#allocation5 + $0x60] sm:$0xff]
    %v61 = vld [vmem:[#allocation5 + $0x68] sm:$0xff]
    %v62 = vld [vmem:[#allocation5 + $0x70] sm:$0xff]
    %v63 = vld [vmem:[#allocation5 + $0x78] sm:$0xff]
    %64 = vmatprep.subr.mxu0 0.0
    %65 = vmatpush1.xpose.msra.mxu0 %v48
    %66 = vmatprep.subr.mxu0 0.0
    %67 = vmatpush1.xpose.msra.mxu0 %v49
    %68 = vmatprep.subr.mxu0 0.0
    %69 = vmatpush1.xpose.msra.mxu0 %v50
    %70 = vmatprep.subr.mxu0 0.0
    %71 = vmatpush1.xpose.msra.mxu0 %v51
    %72 = vmatprep.subr.mxu0 0.0
    %73 = vmatpush1.xpose.msra.mxu0 %v52
    %74 = vmatprep.subr.mxu0 0.0
    %75 = vmatpush1.xpose.msra.mxu0 %v53
    %76 = vmatprep.subr.mxu0 0.0
    %77 = vmatpush1.xpose.msra.mxu0 %v54
    %78 = vmatprep.subr.mxu0 0.0
    %79 = vmatpush1.xpose.msra.mxu0 %v55
    %80 = vmatprep.subr.mxu0 0.0
    %81 = vmatpush1.xpose.msra.mxu0 %v56
    %82 = vmatprep.subr.mxu0 0.0
    %83 = vmatpush1.xpose.msra.mxu0 %v57
    %84 = vmatprep.subr.mxu0 0.0
    %85 = vmatpush1.xpose.msra.mxu0 %v58
    %86 = vmatprep.subr.mxu0 0.0
    %87 = vmatpush1.xpose.msra.mxu0 %v59
    %88 = vmatprep.subr.mxu0 0.0
    %89 = vmatpush1.xpose.msra.mxu0 %v60
    %90 = vmatprep.subr.mxu0 0.0
    %91 = vmatpush1.xpose.msra.mxu0 %v61
    %92 = vmatprep.subr.mxu0 0.0
    %93 = vmatpush1.xpose.msra.mxu0 %v62
    %94 = vmatprep.subr.mxu0 0.0
    %95 = vmatpush1.xpose.msra.mxu0 %v63
    %96 = vmatprep.subr.mxu0 0.0
    %97 = vmatpush1.xpose.msra.mxu0 0.0
    %98 = vmatprep.subr.mxu0 0.0
    %99 = vmatpush1.xpose.msra.mxu0 0.0
    %100 = vmatprep.subr.mxu0 0.0
    %101 = vmatpush1.xpose.msra.mxu0 0.0
    %102 = vmatprep.subr.mxu0 0.0
    %103 = vmatpush1.xpose.msra.mxu0 0.0
    %104 = vmatprep.subr.mxu0 0.0
    %105 = vmatpush1.xpose.msra.mxu0 0.0
    %106 = vmatprep.subr.mxu0 0.0
    %107 = vmatpush1.xpose.msra.mxu0 0.0
    %108 = vmatprep.subr.mxu0 0.0
    %109 = vmatpush1.xpose.msra.mxu0 0.0
    %110 = vmatprep.subr.mxu0 0.0
    %111 = vmatpush1.xpose.msra.mxu0 0.0
    %112 = vmatprep.subr.mxu0 0.0
    %113 = vmatpush1.xpose.msra.mxu0 0.0
    %114 = vmatprep.subr.mxu0 0.0
    %115 = vmatpush1.xpose.msra.mxu0 0.0
    %116 = vmatprep.subr.mxu0 0.0
    %117 = vmatpush1.xpose.msra.mxu0 0.0
    %118 = vmatprep.subr.mxu0 0.0
    %119 = vmatpush1.xpose.msra.mxu0 0.0
    %120 = vmatprep.subr.mxu0 0.0
    %121 = vmatpush1.xpose.msra.mxu0 0.0
    %122 = vmatprep.subr.mxu0 0.0
    %123 = vmatpush1.xpose.msra.mxu0 0.0
    %124 = vmatprep.subr.mxu0 0.0
    %125 = vmatpush1.xpose.msra.mxu0 0.0
    %126 = vmatprep.subr.mxu0 0.0
    %127 = vmatpush1.xpose.msra.mxu0 0.0
    %128 = vmatprep.mubr.f32.mxu0 0.0
    %129 = vmatmul.mubr.f32.gmra.mrb[0].mxu0 %v47
    %v130 = vpop.f32.mrb[0].mxu0
    %v131 = vadd.f32 0.0, %v130
    %v132 = vpop.f32.mrb[0].mxu0
    %133 = vdwg.mxu0
    %v134 = vadd.f32 %v46, %v131
    %135 = vst [vmem:[#allocation7] sm:$0xff] %v134
    // Predicated region
    $region26: #{tpu_custom_call.1} parent=1 // pred_check
      %p136 = pneg %p41
    $region27: #{tpu_custom_call.1} parent=1 // pred_check_branch
      %138 = sbr.rel (%p136) target = $region29
    $region28: #{tpu_custom_call.1} parent=1 // pred_region
      %v139 = vld [vmem:[#allocation7] sm:$0xff]
      %v140 = vld [vmem:[%s2] sm:$0x1]
      %v142 = vlaneseq
      %v143 = vshrl.u32 %v142, 7
      %v144 = vsub.s32 0, %v143
      %v145 = vrot.slane %v140, %v144
      %v147 = vadd.f32 %v139, %v145
      %148 = vst [vmem:[#allocation7] sm:$0xff] %v147
    $region29: #{tpu_custom_call.1} parent=1 // pred_fallthru
      _
    // Predicated region
    $region30: #{tpu_custom_call.1} parent=1 // pred_check
      _
    $region31: #{tpu_custom_call.1} parent=1 // pred_check_branch
      %150 = sbr.rel (0) target = $region33
    $region32: #{tpu_custom_call.1} parent=1 // pred_region
      %s152 = ssub.s32 128, 128
      %153 = vsyncadd [#allocation4], %s152
      %s155 = sshll.u32 [#allocation7], 4
      %s156 = int_to_ptr.vmem [resolvable:$true] %s155
      %158 = dma.vmem_to_hbm [thread:$0]  %s156, 128, %s3, [#allocation4]
    $region33: #{tpu_custom_call.1} parent=1 // pred_fallthru
      _
    // Predicated region
    $region34: #{tpu_custom_call.1} parent=1 // pred_check
      _
    $region35: #{tpu_custom_call.1} parent=1 // pred_check_branch
      %160 = sbr.rel (0) target = $region37
    $region36: #{tpu_custom_call.1} parent=1 // pred_region
      %161 = dma.done [#allocation4], 128
    $region37: #{tpu_custom_call.1} parent=1 // pred_fallthru
      _
    %162 = vsyncpa [#allocation3], 1
    %163 = vsyncpa [#allocation6], 1
    %164 = vsyncpa [#allocation4], 1

</llo_original>
